<compile_context>
chip_gen: v7x
topology: tpu7x:2x2x1
jax: 0.10.0
libtpu: 0.0.40
codegen_flags: <defaults>
</compile_context>

<pallas_src>
import jax
import jax.numpy as jnp
from jax.experimental import pallas as pl
from jax.experimental.pallas import tpu as pltpu


_LANE = 128        # last-dim alignment for unmasked vector stores
_SUBLANE = 8
# Above this batch size, force >=2 grid steps so v7x's two TensorCores both
# get work (neutral on v5e/v6e, which have a single TC).
_MIN_ROWS_FOR_TC_SPLIT = 256
# Switch the grid-invariant weights to single buffering once their default
# double-buffered footprint gets big (matters under v7x's 64 MiB VMEM).
_WEIGHT_SINGLE_BUFFER_BYTES = 8 << 20


def _round_up(n, m):
    return ((n + m - 1) // m) * m


def _ae_kernel(x_ref, w1_ref, b1_ref, w2_ref, b2_ref, o_ref):
    # encoder: Linear(input_features -> 256); f32 accumulation on the MXU
    h = jnp.dot(x_ref[...], w1_ref[...],
                preferred_element_type=jnp.float32) + b1_ref[...]
    # F.leaky_relu default negative_slope = 0.01 (single vmax, no cmp+select)
    h = jnp.maximum(h, 0.01 * h)
    # decoder: Linear(256 -> input_features)
    z = jnp.dot(h.astype(w2_ref.dtype), w2_ref[...],
                preferred_element_type=jnp.float32) + b2_ref[...]
    # sigmoid: exp runs on the EUP; no raw f32 divide on the VALU path
    o_ref[...] = jax.nn.sigmoid(z).astype(o_ref.dtype)


def fully_ae_forward(x, w1, b1, w2, b2, *, tm=1024, use_bf16=False):
    """x: (B, F), w1: (F, H), b1: (H,), w2: (H, F), b2: (F,).

    Returns (B, F) = sigmoid(leaky_relu(x @ w1 + b1) @ w2 + b2).
    """
    B, F = x.shape
    H = w1.shape[1]
    assert w1.shape == (F, H) and w2.shape == (H, F)
    assert b1.shape == (H,) and b2.shape == (F,)
    out_dtype = x.dtype

    # ---- lane-dense layout: pad the feature dim to a multiple of 128 so the
    # output stores are full (unmasked) vst bursts.  No-op when F % 128 == 0.
    F_pad = _round_up(F, _LANE)
    if F_pad != F:
        x = jnp.pad(x, ((0, 0), (0, F_pad - F)))
        w1 = jnp.pad(w1, ((0, F_pad - F), (0, 0)))  # rows meeting zero x cols
        w2 = jnp.pad(w2, ((0, 0), (0, F_pad - F)))  # extra out cols, sliced off
        b2 = jnp.pad(b2, ((0, F_pad - F),))

    # Optional bf16 matmul path (native MXU dtype, biggest win on v5e; also
    # halves x HBM bytes on v6e/v7x).  Bias adds / activations stay f32.
    if use_bf16:
        x = x.astype(jnp.bfloat16)
        w1 = w1.astype(jnp.bfloat16)
        w2 = w2.astype(jnp.bfloat16)
    b1_2d = b1.reshape(1, H).astype(jnp.float32)
    b2_2d = b2.reshape(1, F_pad).astype(jnp.float32)

    # ---- batch tile: multiple of 8 sublanes, capped at the batch; when the
    # batch is large enough, also keep >=2 grid steps for v7x's two TCs.
    tm_cap = _round_up(B, _SUBLANE)
    if B >= _MIN_ROWS_FOR_TC_SPLIT:
        tm_cap = min(tm_cap, _round_up(-(-B // 2), _SUBLANE))
    tm_eff = _round_up(max(_SUBLANE, min(tm, tm_cap)), _SUBLANE)

    # No batch padding / output row-slice: partial edge block is handled by
    # Pallas; garbage rows never reach a valid output row.
    grid = (pl.cdiv(B, tm_eff),)

    # ---- VMEM budget (bytes): double-buffered x/out tiles, weights (1 or 2
    # buffers), the (TM, H) intermediate h and the (TM, F_pad) logits.
    x_isz = jnp.dtype(x.dtype).itemsize
    w_isz = jnp.dtype(w1.dtype).itemsize
    weight_bytes_1buf = (F_pad * H + H * F_pad) * w_isz + (H + F_pad) * 4
    single_buffer_weights = 2 * weight_bytes_1buf > _WEIGHT_SINGLE_BUFFER_BYTES
    w_bufs = 1 if single_buffer_weights else 2
    vmem_needed = (
        2 * tm_eff * F_pad * x_isz          # x tile, double buffered
        + 2 * tm_eff * F_pad * 4            # out tile, double buffered
        + w_bufs * weight_bytes_1buf        # grid-invariant weights / biases
        + tm_eff * H * 4                    # intermediate h
        + tm_eff * F_pad * 4                # logits z
    )
    vmem_limit = min(max(vmem_needed + (4 << 20), 32 << 20), 128 << 20)

    # Single-buffer the invariant weights only when they are big enough for
    # the default double buffering to hurt the VMEM budget (v7x: 64 MiB).
    w_mode = dict(pipeline_mode=pl.Buffered(1)) if single_buffer_weights else {}

    cost = pl.CostEstimate(
        flops=4 * B * F_pad * H,            # two (B, F_pad, H) matmuls
        transcendentals=B * F_pad,          # exp inside the sigmoid
        bytes_accessed=(B * F_pad * (x_isz + 4)
                        + 2 * F_pad * H * w_isz + (H + F_pad) * 4),
    )

    out = pl.pallas_call(
        _ae_kernel,
        out_shape=jax.ShapeDtypeStruct((B, F_pad), out_dtype),
        grid=grid,
        in_specs=[
            pl.BlockSpec((tm_eff, F_pad), lambda i: (i, 0)),        # x tile
            pl.BlockSpec((F_pad, H), lambda i: (0, 0), **w_mode),   # W1
            pl.BlockSpec((1, H), lambda i: (0, 0), **w_mode),       # b1
            pl.BlockSpec((H, F_pad), lambda i: (0, 0), **w_mode),   # W2
            pl.BlockSpec((1, F_pad), lambda i: (0, 0), **w_mode),   # b2
        ],
        out_specs=pl.BlockSpec((tm_eff, F_pad), lambda i: (i, 0)),
        compiler_params=pltpu.CompilerParams(
            dimension_semantics=("parallel",),
            vmem_limit_bytes=vmem_limit,
        ),
        cost_estimate=cost,
    )(x, w1, b1_2d, w2, b2_2d)

    if F_pad != F:
        out = out[:, :F]
    return out


def _reference(x, w1, b1, w2, b2):
    h = x.astype(jnp.float32) @ w1.astype(jnp.float32) + b1
    h = jnp.where(h > 0, h, 0.01 * h)
    z = h @ w2.astype(jnp.float32) + b2
    return 1.0 / (1.0 + jnp.exp(-z))


if __name__ == "__main__":
    H = 256  # hidden width fixed by the module

    def make_params(key, F):
        kw1, kb1, kw2, kb2 = jax.random.split(key, 4)
        # PyTorch nn.Linear default init: U(-1/sqrt(fan_in), 1/sqrt(fan_in))
        bound1 = 1.0 / jnp.sqrt(float(F))
        w1 = jax.random.uniform(kw1, (F, H), minval=-bound1, maxval=bound1,
                                dtype=jnp.float32)
        b1 = jax.random.uniform(kb1, (H,), minval=-bound1, maxval=bound1,
                                dtype=jnp.float32)
        bound2 = 1.0 / jnp.sqrt(float(H))
        w2 = jax.random.uniform(kw2, (H, F), minval=-bound2, maxval=bound2,
                                dtype=jnp.float32)
        b2 = jax.random.uniform(kb2, (F,), minval=-bound2, maxval=bound2,
                                dtype=jnp.float32)
        return w1, b1, w2, b2

    key = jax.random.PRNGKey(0)
    kp, kx1, kx2, kx3, kp2, kx4 = jax.random.split(key, 6)

    # config.input_features = 128 (lane-aligned) for the main cases.
    F = 128
    w1, b1, w2, b2 = make_params(kp, F)

    # Case 1: small batch, single tile.
    x1 = jax.random.normal(kx1, (8, F), dtype=jnp.float32)
    out1 = jax.block_until_ready(fully_ae_forward(x1, w1, b1, w2, b2))
    assert out1.shape == (8, F)
    assert jnp.allclose(out1, _reference(x1, w1, b1, w2, b2),
                        atol=1e-5, rtol=1e-5), "mismatch (case 1)"

    # Case 2: ragged batch with a small tile -> multi-step grid whose last
    # block is partial (exercises the no-pad / no-slice edge handling).
    x2 = jax.random.normal(kx2, (20, F), dtype=jnp.float32)
    out2 = jax.block_until_ready(fully_ae_forward(x2, w1, b1, w2, b2, tm=8))
    assert out2.shape == (20, F)
    assert jnp.allclose(out2, _reference(x2, w1, b1, w2, b2),
                        atol=1e-5, rtol=1e-5), "mismatch (case 2)"

    # Case 3: batch large enough to trigger the >=2-grid-step cap (v7x TCs).
    x3 = jax.random.normal(kx3, (512, F), dtype=jnp.float32)
    out3 = jax.block_until_ready(fully_ae_forward(x3, w1, b1, w2, b2))
    assert out3.shape == (512, F)
    assert jnp.allclose(out3, _reference(x3, w1, b1, w2, b2),
                        atol=1e-5, rtol=1e-5), "mismatch (case 3)"

    # Case 4: input_features not a multiple of 128 -> feature padding for
    # lane-dense stores + column slice on the way out.
    F2 = 72
    w1b, b1b, w2b, b2b = make_params(kp2, F2)
    x4 = jax.random.normal(kx4, (16, F2), dtype=jnp.float32)
    out4 = jax.block_until_ready(fully_ae_forward(x4, w1b, b1b, w2b, b2b))
    assert out4.shape == (16, F2)
    assert jnp.allclose(out4, _reference(x4, w1b, b1b, w2b, b2b),
                        atol=1e-5, rtol=1e-5), "mismatch (case 4)"

    # Case 5: bf16 matmul path (looser tolerance).
    out5 = jax.block_until_ready(
        fully_ae_forward(x1, w1, b1, w2, b2, use_bf16=True))
    assert out5.shape == (8, F)
    assert jnp.allclose(out5, _reference(x1, w1, b1, w2, b2),
                        atol=5e-2, rtol=5e-2), "mismatch (case 5, bf16)"

    print("KERNEL_OK")
</pallas_src>

<mosaic_0001>
module attributes {stable_mosaic.version = 11 : i64} {
  func.func @_ae_kernel(%arg0: i32, %arg1: memref<8x128xf32, #tpu.memory_space<vmem>>, %arg2: memref<128x256xf32, #tpu.memory_space<vmem>>, %arg3: memref<1x256xf32, #tpu.memory_space<vmem>>, %arg4: memref<256x128xf32, #tpu.memory_space<vmem>>, %arg5: memref<1x128xf32, #tpu.memory_space<vmem>>, %arg6: memref<8x128xf32, #tpu.memory_space<vmem>>) attributes {dimension_semantics = [#tpu.dimension_semantics<parallel>], iteration_bounds = array<i64: 1>, scalar_prefetch = 0 : i64, scratch_operands = 0 : i64, tpu.core_type = #tpu.core_type<tc>, window_params = [{transform_indices = @transform_0, window_bounds = array<i64: 8, 128>}, {pipeline_mode = #tpu.pipeline_mode<synchronous>, transform_indices = @transform_1, window_bounds = array<i64: 128, 256>}, {pipeline_mode = #tpu.pipeline_mode<synchronous>, transform_indices = @transform_2, window_bounds = array<i64: 1, 256>}, {pipeline_mode = #tpu.pipeline_mode<synchronous>, transform_indices = @transform_3, window_bounds = array<i64: 256, 128>}, {pipeline_mode = #tpu.pipeline_mode<synchronous>, transform_indices = @transform_4, window_bounds = array<i64: 1, 128>}, {transform_indices = @transform_5, window_bounds = array<i64: 8, 128>}]} {
    %c0 = arith.constant 0 : index
    %c0_0 = arith.constant 0 : index
    %0 = vector.load %arg1[%c0, %c0_0] : memref<8x128xf32, #tpu.memory_space<vmem>>, vector<8x128xf32>
    %c0_1 = arith.constant 0 : index
    %c0_2 = arith.constant 0 : index
    %1 = vector.load %arg2[%c0_1, %c0_2] : memref<128x256xf32, #tpu.memory_space<vmem>>, vector<128x256xf32>
    %cst = arith.constant dense<0.000000e+00> : vector<8x256xf32>
    %2 = tpu.matmul %0, %1, %cst {dimension_numbers = #tpu.dot_dimension_numbers<[1], [0], [0], [1], [0, 0, 1, 1], [], []>} : vector<8x128xf32>, vector<128x256xf32>, vector<8x256xf32> -> vector<8x256xf32>
    %c0_3 = arith.constant 0 : index
    %c0_4 = arith.constant 0 : index
    %3 = vector.load %arg3[%c0_3, %c0_4] : memref<1x256xf32, #tpu.memory_space<vmem>>, vector<1x256xf32>
    %4 = vector.broadcast %3 : vector<1x256xf32> to vector<8x256xf32>
    %5 = arith.addf %2, %4 : vector<8x256xf32>
    %cst_5 = arith.constant 0.00999999977 : f32
    %6 = vector.broadcast %cst_5 : f32 to vector<8x256xf32>
    %7 = arith.mulf %6, %5 : vector<8x256xf32>
    %8 = arith.maximumf %5, %7 : vector<8x256xf32>
    %c0_6 = arith.constant 0 : index
    %c0_7 = arith.constant 0 : index
    %9 = vector.load %arg4[%c0_6, %c0_7] : memref<256x128xf32, #tpu.memory_space<vmem>>, vector<256x128xf32>
    %cst_8 = arith.constant dense<0.000000e+00> : vector<8x128xf32>
    %10 = tpu.matmul %8, %9, %cst_8 {dimension_numbers = #tpu.dot_dimension_numbers<[1], [0], [0], [1], [0, 0, 1, 1], [], []>} : vector<8x256xf32>, vector<256x128xf32>, vector<8x128xf32> -> vector<8x128xf32>
    %c0_9 = arith.constant 0 : index
    %c0_10 = arith.constant 0 : index
    %11 = vector.load %arg5[%c0_9, %c0_10] : memref<1x128xf32, #tpu.memory_space<vmem>>, vector<1x128xf32>
    %12 = vector.broadcast %11 : vector<1x128xf32> to vector<8x128xf32>
    %13 = arith.addf %10, %12 : vector<8x128xf32>
    %14 = arith.negf %13 : vector<8x128xf32>
    %15 = math.exp %14 : vector<8x128xf32>
    %cst_11 = arith.constant 1.000000e+00 : f32
    %16 = vector.broadcast %cst_11 : f32 to vector<8x128xf32>
    %17 = arith.addf %16, %15 : vector<8x128xf32>
    %18 = arith.divf %16, %17 : vector<8x128xf32>
    %c0_12 = arith.constant 0 : index
    %c0_13 = arith.constant 0 : index
    %19 = vector.load %arg6[%c0_12, %c0_13] : memref<8x128xf32, #tpu.memory_space<vmem>>, vector<8x128xf32>
    tpu.vector_store %arg6[%c0_12, %c0_13], %18 {strides = array<i32>} : memref<8x128xf32, #tpu.memory_space<vmem>>, vector<8x128xf32>,
    return
  }
  func.func @transform_0(%arg0: i32) -> (i32, i32) {
    %c0_i32 = arith.constant 0 : i32
    %c0_i32_0 = arith.constant 0 : i32
    return %arg0, %c0_i32 : i32, i32
  }
  func.func @transform_1(%arg0: i32) -> (i32, i32) {
    %c0_i32 = arith.constant 0 : i32
    %c0_i32_0 = arith.constant 0 : i32
    %c0_i32_1 = arith.constant 0 : i32
    return %c0_i32, %c0_i32_0 : i32, i32
  }
  func.func @transform_2(%arg0: i32) -> (i32, i32) {
    %c0_i32 = arith.constant 0 : i32
    %c0_i32_0 = arith.constant 0 : i32
    %c0_i32_1 = arith.constant 0 : i32
    return %c0_i32, %c0_i32_0 : i32, i32
  }
  func.func @transform_3(%arg0: i32) -> (i32, i32) {
    %c0_i32 = arith.constant 0 : i32
    %c0_i32_0 = arith.constant 0 : i32
    %c0_i32_1 = arith.constant 0 : i32
    return %c0_i32, %c0_i32_0 : i32, i32
  }
  func.func @transform_4(%arg0: i32) -> (i32, i32) {
    %c0_i32 = arith.constant 0 : i32
    %c0_i32_0 = arith.constant 0 : i32
    %c0_i32_1 = arith.constant 0 : i32
    return %c0_i32, %c0_i32_0 : i32, i32
  }
  func.func @transform_5(%arg0: i32) -> (i32, i32) {
    %c0_i32 = arith.constant 0 : i32
    %c0_i32_0 = arith.constant 0 : i32
    return %arg0, %c0_i32 : i32, i32
  }
}

</mosaic_0001>

<llo_original>
// kernel: tpu_custom_call.1
$region0: #{tpu_custom_call.1}
  #allocation0 [shape = 'u32[]', space=smem, size = 0x4, offset = 0x4, fixed_abs, tag = 'smem constant byte address 0x4 - core index']
  #allocation1 [shape = 'u32[144,128]{1,0:T(1,128)}', space=vmem, size = 0x12000, scoped, tag = 'internal scratch']
  %s0 = inlined_call_operand.hbm [shape: f32[8,128], index: 0, kind: input, shape index: {}]
  %s1 = inlined_call_operand.hbm [shape: f32[128,256], index: 1, kind: input, shape index: {}]
  %s2 = inlined_call_operand.vmem [shape: f32[1,256], index: 2, kind: input, shape index: {}]
  %s3 = inlined_call_operand.hbm [shape: f32[256,128], index: 3, kind: input, shape index: {}]
  %s4 = inlined_call_operand.vmem [shape: f32[1,128], index: 4, kind: input, shape index: {}]
  %s5 = inlined_call_operand.hbm [shape: f32[8,128], index: 5, kind: output, shape index: {}]
  %s6 = sld [smem:[#allocation0]]
  $region42: #{tpu_custom_call.1} parent=0
    _
  %s8 = ssub.s32 1, %s6
  %s9 = scalar_select 0, %s8, %s6
  $region1: #{tpu_custom_call.1} parent=0
    #allocation2 [shape = 'u8[4096]{0}', space=vmem, size = 0x1000, scoped, tag = 'input window, operand 0, single buffered']
    #allocation3 [shape = 's32[1]{0}', space=sflag, size = 0x4, scoped, tag = 'scoped memory for tpu_custom_call.1']
    #allocation4 [shape = 's32[1]{0}', space=sflag, size = 0x4, scoped, tag = 'scoped memory for tpu_custom_call.1']
    #allocation5 [shape = 'u8[131072]{0}', space=vmem, size = 0x20000, scoped, tag = 'input window, operand 1, single buffered']
    #allocation6 [shape = 's32[1]{0}', space=sflag, size = 0x4, scoped, tag = 'scoped memory for tpu_custom_call.1']
    #allocation7 [shape = 'u8[131072]{0}', space=vmem, size = 0x20000, scoped, tag = 'input window, operand 3, single buffered']
    #allocation8 [shape = 'u8[4096]{0}', space=vmem, size = 0x1000, scoped, tag = 'output window, operand 0, single buffered']
    %10 = vsyncpa [#allocation3], 0
    %11 = vsyncpa [#allocation6], 0
    %12 = vsyncpa [#allocation4], 0
    // Predicated region
    $region2: #{tpu_custom_call.1} parent=1 // pred_check
      _
    $region3: #{tpu_custom_call.1} parent=1 // pred_check_branch
      %14 = sbr.rel (0) target = $region5
    $region4: #{tpu_custom_call.1} parent=1 // pred_region
      %s16 = ssub.s32 128, 128
      %17 = vsyncadd [#allocation3], %s16
      %s19 = sshll.u32 [#allocation2], 4
      %s20 = int_to_ptr.vmem [resolvable:$true] %s19
      %22 = dma.hbm_to_vmem [thread:$0]  %s0, 128, %s20, [#allocation3]
    $region5: #{tpu_custom_call.1} parent=1 // pred_fallthru
      _
    // Predicated region
    $region6: #{tpu_custom_call.1} parent=1 // pred_check
      _
    $region7: #{tpu_custom_call.1} parent=1 // pred_check_branch
      %24 = sbr.rel (0) target = $region9
    $region8: #{tpu_custom_call.1} parent=1 // pred_region
      %s26 = ssub.s32 4096, 4096
      %27 = vsyncadd [#allocation6], %s26
      %s28 = sshll.u32 [#allocation5], 4
      %s29 = int_to_ptr.vmem [resolvable:$true] %s28
      %34 = dma.hbm_to_vmem [thread:$0]  %s1, 4096, %s29, [#allocation6], 256, 256, 16
    $region9: #{tpu_custom_call.1} parent=1 // pred_fallthru
      _
    // Predicated region
    $region10: #{tpu_custom_call.1} parent=1 // pred_check
      _
    $region11: #{tpu_custom_call.1} parent=1 // pred_check_branch
      %36 = sbr.rel (0) target = $region13
    $region12: #{tpu_custom_call.1} parent=1 // pred_region
      _
    $region13: #{tpu_custom_call.1} parent=1 // pred_fallthru
      _
    // Predicated region
    $region14: #{tpu_custom_call.1} parent=1 // pred_check
      _
    $region15: #{tpu_custom_call.1} parent=1 // pred_check_branch
      %38 = sbr.rel (0) target = $region17
    $region16: #{tpu_custom_call.1} parent=1 // pred_region
      %s40 = ssub.s32 4096, 4096
      %41 = vsyncadd [#allocation6], %s40
      %s42 = sshll.u32 [#allocation7], 4
      %s43 = int_to_ptr.vmem [resolvable:$true] %s42
      %48 = dma.hbm_to_vmem [thread:$0]  %s3, 4096, %s43, [#allocation6], 128, 128, 8
    $region17: #{tpu_custom_call.1} parent=1 // pred_fallthru
      _
    // Predicated region
    $region18: #{tpu_custom_call.1} parent=1 // pred_check
      _
    $region19: #{tpu_custom_call.1} parent=1 // pred_check_branch
      %50 = sbr.rel (0) target = $region21
    $region20: #{tpu_custom_call.1} parent=1 // pred_region
      _
    $region21: #{tpu_custom_call.1} parent=1 // pred_fallthru
      _
    // Predicated region
    $region22: #{tpu_custom_call.1} parent=1 // pred_check
      _
    $region23: #{tpu_custom_call.1} parent=1 // pred_check_branch
      %52 = sbr.rel (0) target = $region25
    $region24: #{tpu_custom_call.1} parent=1 // pred_region
      %53 = dma.done [#allocation3], 128
    $region25: #{tpu_custom_call.1} parent=1 // pred_fallthru
      _
    // Predicated region
    $region26: #{tpu_custom_call.1} parent=1 // pred_check
      _
    $region27: #{tpu_custom_call.1} parent=1 // pred_check_branch
      %55 = sbr.rel (0) target = $region29
    $region28: #{tpu_custom_call.1} parent=1 // pred_region
      %56 = dma.done [#allocation6], 4096
    $region29: #{tpu_custom_call.1} parent=1 // pred_fallthru
      _
    // Predicated region
    $region30: #{tpu_custom_call.1} parent=1 // pred_check
      _
    $region31: #{tpu_custom_call.1} parent=1 // pred_check_branch
      %58 = sbr.rel (0) target = $region33
    $region32: #{tpu_custom_call.1} parent=1 // pred_region
      %59 = dma.done [#allocation6], 4096
    $region33: #{tpu_custom_call.1} parent=1 // pred_fallthru
      _
    %v60 = vld [vmem:[#allocation2] sm:$0xff]
    %v61 = vld [vmem:[#allocation5] sm:$0xff]
    %v62 = vld [vmem:[#allocation5 + $0x8] sm:$0xff]
    %v63 = vld [vmem:[#allocation5 + $0x10] sm:$0xff]
    %v64 = vld [vmem:[#allocation5 + $0x18] sm:$0xff]
    %v65 = vld [vmem:[#allocation5 + $0x20] sm:$0xff]
    %v66 = vld [vmem:[#allocation5 + $0x28] sm:$0xff]
    %v67 = vld [vmem:[#allocation5 + $0x30] sm:$0xff]
    %v68 = vld [vmem:[#allocation5 + $0x38] sm:$0xff]
    %v69 = vld [vmem:[#allocation5 + $0x40] sm:$0xff]
    %v70 = vld [vmem:[#allocation5 + $0x48] sm:$0xff]
    %v71 = vld [vmem:[#allocation5 + $0x50] sm:$0xff]
    %v72 = vld [vmem:[#allocation5 + $0x58] sm:$0xff]
    %v73 = vld [vmem:[#allocation5 + $0x60] sm:$0xff]
    %v74 = vld [vmem:[#allocation5 + $0x68] sm:$0xff]
    %v75 = vld [vmem:[#allocation5 + $0x70] sm:$0xff]
    %v76 = vld [vmem:[#allocation5 + $0x78] sm:$0xff]
    %v77 = vld [vmem:[#allocation5 + $0x80] sm:$0xff]
    %v78 = vld [vmem:[#allocation5 + $0x88] sm:$0xff]
    %v79 = vld [vmem:[#allocation5 + $0x90] sm:$0xff]
    %v80 = vld [vmem:[#allocation5 + $0x98] sm:$0xff]
    %v81 = vld [vmem:[#allocation5 + $0xa0] sm:$0xff]
    %v82 = vld [vmem:[#allocation5 + $0xa8] sm:$0xff]
    %v83 = vld [vmem:[#allocation5 + $0xb0] sm:$0xff]
    %v84 = vld [vmem:[#allocation5 + $0xb8] sm:$0xff]
    %v85 = vld [vmem:[#allocation5 + $0xc0] sm:$0xff]
    %v86 = vld [vmem:[#allocation5 + $0xc8] sm:$0xff]
    %v87 = vld [vmem:[#allocation5 + $0xd0] sm:$0xff]
    %v88 = vld [vmem:[#allocation5 + $0xd8] sm:$0xff]
    %v89 = vld [vmem:[#allocation5 + $0xe0] sm:$0xff]
    %v90 = vld [vmem:[#allocation5 + $0xe8] sm:$0xff]
    %v91 = vld [vmem:[#allocation5 + $0xf0] sm:$0xff]
    %v92 = vld [vmem:[#allocation5 + $0xf8] sm:$0xff]
    %v93 = vld [vmem:[%s2] sm:$0x3]
    %v95 = vlaneseq
    %v96 = vshrl.u32 %v95, 7
    %v97 = vsub.s32 0, %v96
    %v98 = vrot.slane %v93, %v97
    %v99 = vlaneseq
    %v100 = vshrl.u32 %v99, 7
    %v101 = vsub.s32 1, %v100
    %v102 = vrot.slane %v93, %v101
    %105 = vmatprep.subr.mxu0 %v62
    %106 = vmatpush1.msra.mxu0 %v61
    %107 = vmatprep.subr.mxu0 %v64
    %108 = vmatpush1.msra.mxu0 %v63
    %109 = vmatprep.subr.mxu0 %v66
    %110 = vmatpush1.msra.mxu0 %v65
    %111 = vmatprep.subr.mxu0 %v68
    %112 = vmatpush1.msra.mxu0 %v67
    %113 = vmatprep.subr.mxu0 %v70
    %114 = vmatpush1.msra.mxu0 %v69
    %115 = vmatprep.subr.mxu0 %v72
    %116 = vmatpush1.msra.mxu0 %v71
    %117 = vmatprep.subr.mxu0 %v74
    %118 = vmatpush1.msra.mxu0 %v73
    %119 = vmatprep.subr.mxu0 %v76
    %120 = vmatpush1.msra.mxu0 %v75
    %121 = vmatprep.subr.mxu0 %v78
    %122 = vmatpush1.msra.mxu0 %v77
    %123 = vmatprep.subr.mxu0 %v80
    %124 = vmatpush1.msra.mxu0 %v79
    %125 = vmatprep.subr.mxu0 %v82
    %126 = vmatpush1.msra.mxu0 %v81
    %127 = vmatprep.subr.mxu0 %v84
    %128 = vmatpush1.msra.mxu0 %v83
    %129 = vmatprep.subr.mxu0 %v86
    %130 = vmatpush1.msra.mxu0 %v85
    %131 = vmatprep.subr.mxu0 %v88
    %132 = vmatpush1.msra.mxu0 %v87
    %133 = vmatprep.subr.mxu0 %v90
    %134 = vmatpush1.msra.mxu0 %v89
    %135 = vmatprep.subr.mxu0 %v92
    %136 = vmatpush1.msra.mxu0 %v91
    %137 = vmatprep.subr.mxu0 0.0
    %138 = vmatpush1.msra.mxu0 0.0
    %139 = vmatprep.subr.mxu0 0.0
    %140 = vmatpush1.msra.mxu0 0.0
    %141 = vmatprep.subr.mxu0 0.0
    %142 = vmatpush1.msra.mxu0 0.0
    %143 = vmatprep.subr.mxu0 0.0
    %144 = vmatpush1.msra.mxu0 0.0
    %145 = vmatprep.subr.mxu0 0.0
    %146 = vmatpush1.msra.mxu0 0.0
    %147 = vmatprep.subr.mxu0 0.0
    %148 = vmatpush1.msra.mxu0 0.0
    %149 = vmatprep.subr.mxu0 0.0
    %150 = vmatpush1.msra.mxu0 0.0
    %151 = vmatprep.subr.mxu0 0.0
    %152 = vmatpush1.msra.mxu0 0.0
    %153 = vmatprep.subr.mxu0 0.0
    %154 = vmatpush1.msra.mxu0 0.0
    %155 = vmatprep.subr.mxu0 0.0
    %156 = vmatpush1.msra.mxu0 0.0
    %157 = vmatprep.subr.mxu0 0.0
    %158 = vmatpush1.msra.mxu0 0.0
    %159 = vmatprep.subr.mxu0 0.0
    %160 = vmatpush1.msra.mxu0 0.0
    %161 = vmatprep.subr.mxu0 0.0
    %162 = vmatpush1.msra.mxu0 0.0
    %163 = vmatprep.subr.mxu0 0.0
    %164 = vmatpush1.msra.mxu0 0.0
    %165 = vmatprep.subr.mxu0 0.0
    %166 = vmatpush1.msra.mxu0 0.0
    %167 = vmatprep.subr.mxu0 0.0
    %168 = vmatpush1.msra.mxu0 0.0
    %169 = vmatprep.mubr.f32.mxu0 0.0
    %170 = vmatmul.mubr.f32.gmra.mrb[0].mxu0 %v60
    %v171 = vpop.f32.mrb[0].mxu0
    %v172 = vadd.f32 %v98, %v171
    %v173 = vpop.f32.mrb[0].mxu0
    %v174 = vadd.f32 %v102, %v173
    %175 = vdwg.mxu0
    %v176 = vmul.f32 %v172, 0.01
    %v177 = vmul.f32 %v174, 0.01
    %v178 = vmax.f32 %v172, %v176
    %v179 = vmax.f32 %v174, %v177
    %v180 = vld [vmem:[#allocation7] sm:$0xff]
    %v181 = vld [vmem:[#allocation7 + $0x8] sm:$0xff]
    %v182 = vld [vmem:[#allocation7 + $0x10] sm:$0xff]
    %v183 = vld [vmem:[#allocation7 + $0x18] sm:$0xff]
    %v184 = vld [vmem:[#allocation7 + $0x20] sm:$0xff]
    %v185 = vld [vmem:[#allocation7 + $0x28] sm:$0xff]
    %v186 = vld [vmem:[#allocation7 + $0x30] sm:$0xff]
    %v187 = vld [vmem:[#allocation7 + $0x38] sm:$0xff]
    %v188 = vld [vmem:[#allocation7 + $0x40] sm:$0xff]
    %v189 = vld [vmem:[#allocation7 + $0x48] sm:$0xff]
    %v190 = vld [vmem:[#allocation7 + $0x50] sm:$0xff]
    %v191 = vld [vmem:[#allocation7 + $0x58] sm:$0xff]
    %v192 = vld [vmem:[#allocation7 + $0x60] sm:$0xff]
    %v193 = vld [vmem:[#allocation7 + $0x68] sm:$0xff]
    %v194 = vld [vmem:[#allocation7 + $0x70] sm:$0xff]
    %v195 = vld [vmem:[#allocation7 + $0x78] sm:$0xff]
    %v196 = vld [vmem:[#allocation7 + $0x80] sm:$0xff]
    %v197 = vld [vmem:[#allocation7 + $0x88] sm:$0xff]
    %v198 = vld [vmem:[#allocation7 + $0x90] sm:$0xff]
    %v199 = vld [vmem:[#allocation7 + $0x98] sm:$0xff]
    %v200 = vld [vmem:[#allocation7 + $0xa0] sm:$0xff]
    %v201 = vld [vmem:[#allocation7 + $0xa8] sm:$0xff]
    %v202 = vld [vmem:[#allocation7 + $0xb0] sm:$0xff]
    %v203 = vld [vmem:[#allocation7 + $0xb8] sm:$0xff]
    %v204 = vld [vmem:[#allocation7 + $0xc0] sm:$0xff]
    %v205 = vld [vmem:[#allocation7 + $0xc8] sm:$0xff]
    %v206 = vld [vmem:[#allocation7 + $0xd0] sm:$0xff]
    %v207 = vld [vmem:[#allocation7 + $0xd8] sm:$0xff]
    %v208 = vld [vmem:[#allocation7 + $0xe0] sm:$0xff]
    %v209 = vld [vmem:[#allocation7 + $0xe8] sm:$0xff]
    %v210 = vld [vmem:[#allocation7 + $0xf0] sm:$0xff]
    %v211 = vld [vmem:[#allocation7 + $0xf8] sm:$0xff]
    %v212 = vld [vmem:[%s4] sm:$0x1]
    %v214 = vlaneseq
    %v215 = vshrl.u32 %v214, 7
    %v216 = vsub.s32 0, %v215
    %v217 = vrot.slane %v212, %v216
    %219 = vmatprep.subr.mxu0 0.0
    %220 = vmatpush1.msra.mxu0 %v180
    %221 = vmatprep.subr.mxu0 0.0
    %222 = vmatpush1.msra.mxu0 %v181
    %223 = vmatprep.subr.mxu0 0.0
    %224 = vmatpush1.msra.mxu0 %v182
    %225 = vmatprep.subr.mxu0 0.0
    %226 = vmatpush1.msra.mxu0 %v183
    %227 = vmatprep.subr.mxu0 0.0
    %228 = vmatpush1.msra.mxu0 %v184
    %229 = vmatprep.subr.mxu0 0.0
    %230 = vmatpush1.msra.mxu0 %v185
    %231 = vmatprep.subr.mxu0 0.0
    %232 = vmatpush1.msra.mxu0 %v186
    %233 = vmatprep.subr.mxu0 0.0
    %234 = vmatpush1.msra.mxu0 %v187
    %235 = vmatprep.subr.mxu0 0.0
    %236 = vmatpush1.msra.mxu0 %v188
    %237 = vmatprep.subr.mxu0 0.0
    %238 = vmatpush1.msra.mxu0 %v189
    %239 = vmatprep.subr.mxu0 0.0
    %240 = vmatpush1.msra.mxu0 %v190
    %241 = vmatprep.subr.mxu0 0.0
    %242 = vmatpush1.msra.mxu0 %v191
    %243 = vmatprep.subr.mxu0 0.0
    %244 = vmatpush1.msra.mxu0 %v192
    %245 = vmatprep.subr.mxu0 0.0
    %246 = vmatpush1.msra.mxu0 %v193
    %247 = vmatprep.subr.mxu0 0.0
    %248 = vmatpush1.msra.mxu0 %v194
    %249 = vmatprep.subr.mxu0 0.0
    %250 = vmatpush1.msra.mxu0 %v195
    %251 = vmatprep.subr.mxu0 0.0
    %252 = vmatpush1.msra.mxu0 %v196
    %253 = vmatprep.subr.mxu0 0.0
    %254 = vmatpush1.msra.mxu0 %v197
    %255 = vmatprep.subr.mxu0 0.0
    %256 = vmatpush1.msra.mxu0 %v198
    %257 = vmatprep.subr.mxu0 0.0
    %258 = vmatpush1.msra.mxu0 %v199
    %259 = vmatprep.subr.mxu0 0.0
    %260 = vmatpush1.msra.mxu0 %v200
    %261 = vmatprep.subr.mxu0 0.0
    %262 = vmatpush1.msra.mxu0 %v201
    %263 = vmatprep.subr.mxu0 0.0
    %264 = vmatpush1.msra.mxu0 %v202
    %265 = vmatprep.subr.mxu0 0.0
    %266 = vmatpush1.msra.mxu0 %v203
    %267 = vmatprep.subr.mxu0 0.0
    %268 = vmatpush1.msra.mxu0 %v204
    %269 = vmatprep.subr.mxu0 0.0
    %270 = vmatpush1.msra.mxu0 %v205
    %271 = vmatprep.subr.mxu0 0.0
    %272 = vmatpush1.msra.mxu0 %v206
    %273 = vmatprep.subr.mxu0 0.0
    %274 = vmatpush1.msra.mxu0 %v207
    %275 = vmatprep.subr.mxu0 0.0
    %276 = vmatpush1.msra.mxu0 %v208
    %277 = vmatprep.subr.mxu0 0.0
    %278 = vmatpush1.msra.mxu0 %v209
    %279 = vmatprep.subr.mxu0 0.0
    %280 = vmatpush1.msra.mxu0 %v210
    %281 = vmatprep.subr.mxu0 0.0
    %282 = vmatpush1.msra.mxu0 %v211
    %283 = vmatprep.mubr.f32.mxu0 %v179
    %284 = vmatmul.mubr.f32.gmra.mrb[0].mxu0 %v178
    %v285 = vpop.f32.mrb[0].mxu0
    %v286 = vadd.f32 %v217, %v285
    %v287 = vpop.f32.mrb[0].mxu0
    %288 = vdwg.mxu0
    %v289 = vxor.u32 %v286, 2147483648
    %v290 = vmul.f32 %v289, 1.442695
    %v291 = vpow.pop %v290
    %v292 = vadd.f32 %v291, 1.0
    %v293 = vrcp.pop %v292
    %v294 = vmul.f32 1.0, %v293
    %295 = vst [vmem:[#allocation8] sm:$0xff] %v294
    // Predicated region
    $region34: #{tpu_custom_call.1} parent=1 // pred_check
      _
    $region35: #{tpu_custom_call.1} parent=1 // pred_check_branch
      %297 = sbr.rel (0) target = $region37
    $region36: #{tpu_custom_call.1} parent=1 // pred_region
      %s299 = ssub.s32 128, 128
      %300 = vsyncadd [#allocation4], %s299
      %s302 = sshll.u32 [#allocation8], 4
      %s303 = int_to_ptr.vmem [resolvable:$true] %s302
      %305 = dma.vmem_to_hbm [thread:$0]  %s303, 128, %s5, [#allocation4]
    $region37: #{tpu_custom_call.1} parent=1 // pred_fallthru
      _
    // Predicated region
    $region38: #{tpu_custom_call.1} parent=1 // pred_check
      _
    $region39: #{tpu_custom_call.1} parent=1 // pred_check_branch
      %307 = sbr.rel (0) target = $region41
    $region40: #{tpu_custom_call.1} parent=1 // pred_region
      %308 = dma.done [#allocation4], 128
    $region41: #{tpu_custom_call.1} parent=1 // pred_fallthru
      _
    %309 = vsyncpa [#allocation3], 1
    %310 = vsyncpa [#allocation6], 1
    %311 = vsyncpa [#allocation4], 1

</llo_original>
